<compile_context>
chip_gen: v5e
topology: v5e:2x2
jax: 0.10.0
libtpu: 0.0.40
codegen_flags: <defaults>
</compile_context>

<pallas_src>
import jax
import jax.numpy as jnp
from jax.experimental import pallas as pl
from jax.experimental.pallas import tpu as pltpu


def _round_up(n, m):
    return ((n + m - 1) // m) * m


def _snb_kernel(x_ref, l_ref, w_ref, b_ref, tc_ref, probs_ref):
    # x_ref:  (tile, D_in_p)        l_ref: (tile, 1)
    # w_ref:  (D_in_p, 2*D_out_p)   b_ref: (1, 2*D_out_p)
    # tc_ref, probs_ref: (tile, D_out_p)
    d = tc_ref.shape[-1]

    x = x_ref[...]
    # Single fused matmul for both heads, f32 accumulation on the MXU.
    logits = jnp.dot(x, w_ref[...], preferred_element_type=jnp.float32) + b_ref[...]

    mean_logits = logits[:, :d]     # softmax head
    tc_logits = logits[:, d:]       # total_count head (disp == 'feature-sample')

    # Softmax numerator / denominator (normalization folded into probs below).
    m = jnp.max(mean_logits, axis=-1, keepdims=True)
    e = jnp.exp(mean_logits - m)
    s = jnp.sum(e, axis=-1, keepdims=True)

    total_count = jnp.exp(tc_logits)

    # probs = (softmax(e) * l) / (softmax(e) * l + tc)
    #       = (e * l) / (e * l + tc * s)     <- one divide, no explicit softmax div
    num = e * l_ref[...]                     # (tile, 1) broadcasts over features
    probs = num / (num + total_count * s)

    tc_ref[...] = total_count.astype(tc_ref.dtype)
    probs_ref[...] = probs.astype(probs_ref.dtype)


def scaled_negative_binomial_sl(x, l, w_mean, b_mean, w_tc, b_tc, *, tile_b=256):
    """Returns (total_count, probs) of the NegativeBinomial distribution.

    x      : (B, D_in)  float32
    l      : (B, 1)     float32
    w_mean : (D_in, D_out), b_mean: (1, D_out)   (weights pre-transposed)
    w_tc   : (D_in, D_out), b_tc  : (1, D_out)
    """
    B, D_in = x.shape
    D_out = w_mean.shape[1]
    f32 = jnp.float32

    # Lane-aligned feature dims; sublane-aligned batch tile.
    D_in_p = _round_up(D_in, 128)
    D_out_p = _round_up(D_out, 128)
    tile = max(8, _round_up(min(tile_b, _round_up(B, 8)), 8))
    B_p = _round_up(B, tile)
    grid = (B_p // tile,)

    # ---- pad inputs (zero x rows/cols; l=1 on padded rows to stay finite) ----
    x_p = jnp.zeros((B_p, D_in_p), f32).at[:B, :D_in].set(x.astype(f32))
    l_p = jnp.ones((B_p, 1), f32).at[:B, :].set(l.astype(f32))

    # ---- fused weight slab: [W_mean | W_tc], zero rows for padded D_in ----
    w = jnp.zeros((D_in_p, 2 * D_out_p), f32)
    w = w.at[:D_in, :D_out].set(w_mean.astype(f32))
    w = w.at[:D_in, D_out_p:D_out_p + D_out].set(w_tc.astype(f32))
    # Padded softmax columns get a huge negative bias -> exp(.) == 0, so they do
    # not perturb the softmax sum. Padded tc columns get bias 0 (harmless).
    b_mean_p = jnp.full((1, D_out_p), -1e30, f32).at[:, :D_out].set(
        b_mean.reshape(1, -1).astype(f32))
    b_tc_p = jnp.zeros((1, D_out_p), f32).at[:, :D_out].set(
        b_tc.reshape(1, -1).astype(f32))
    b = jnp.concatenate([b_mean_p, b_tc_p], axis=1)  # (1, 2*D_out_p)

    in_specs = [
        pl.BlockSpec((tile, D_in_p), lambda i: (i, 0)),        # x
        pl.BlockSpec((tile, 1), lambda i: (i, 0)),             # l
        pl.BlockSpec((D_in_p, 2 * D_out_p), lambda i: (0, 0)),  # fused weights
        pl.BlockSpec((1, 2 * D_out_p), lambda i: (0, 0)),       # fused bias
    ]
    out_specs = (
        pl.BlockSpec((tile, D_out_p), lambda i: (i, 0)),        # total_count
        pl.BlockSpec((tile, D_out_p), lambda i: (i, 0)),        # probs
    )
    out_shape = (
        jax.ShapeDtypeStruct((B_p, D_out_p), f32),
        jax.ShapeDtypeStruct((B_p, D_out_p), f32),
    )

    # ---- explicit VMEM budget (double-buffered blocks), capped for v7x ----
    block_bytes = 4 * (
        2 * tile * D_in_p               # x tile
        + 2 * tile * 128                # l tile (lane-padded in VMEM)
        + 2 * D_in_p * 2 * D_out_p      # fused weights
        + 2 * 8 * 2 * D_out_p           # fused bias (sublane-padded)
        + 2 * 2 * tile * D_out_p        # two output tiles
    )
    vmem_limit = int(min(max(2 * block_bytes, 16 * 1024 * 1024), 64 * 1024 * 1024))

    cost = pl.CostEstimate(
        flops=2 * B_p * D_in_p * 2 * D_out_p,
        transcendentals=2 * B_p * D_out_p,
        bytes_accessed=4 * (B_p * D_in_p + B_p + D_in_p * 2 * D_out_p
                            + 2 * D_out_p + 2 * B_p * D_out_p),
    )

    tc_p, probs_p = pl.pallas_call(
        _snb_kernel,
        out_shape=out_shape,
        grid_spec=pltpu.PrefetchScalarGridSpec(
            num_scalar_prefetch=0,
            grid=grid,
            in_specs=in_specs,
            out_specs=out_specs,
        ),
        compiler_params=pltpu.CompilerParams(
            dimension_semantics=("parallel",),
            vmem_limit_bytes=vmem_limit,
        ),
        cost_estimate=cost,
    )(x_p, l_p, w, b)

    return tc_p[:B, :D_out], probs_p[:B, :D_out]


if __name__ == "__main__":
    # Small shapes consistent with the module: batch=16, in_features=64,
    # out_features=128. (D_in=64 exercises the pad-to-128 path.)
    B, D_IN, D_OUT = 16, 64, 128

    key = jax.random.PRNGKey(0)
    kx, kl, kwm, kbm, kwt, kbt = jax.random.split(key, 6)

    x = jax.random.normal(kx, (B, D_IN), dtype=jnp.float32)
    # library size l: positive scalar per sample (like total counts per cell)
    l = jnp.exp(jax.random.normal(kl, (B, 1), dtype=jnp.float32)) * 100.0

    # Deterministic "Linear"-style parameter init (synthetic).
    scale = 1.0 / jnp.sqrt(jnp.float32(D_IN))
    w_mean = jax.random.uniform(kwm, (D_IN, D_OUT), jnp.float32, -scale, scale)
    b_mean = jax.random.uniform(kbm, (1, D_OUT), jnp.float32, -scale, scale)
    w_tc = jax.random.uniform(kwt, (D_IN, D_OUT), jnp.float32, -scale, scale)
    b_tc = jax.random.uniform(kbt, (1, D_OUT), jnp.float32, -scale, scale)

    total_count, probs = scaled_negative_binomial_sl(
        x, l, w_mean, b_mean, w_tc, b_tc, tile_b=256)
    jax.block_until_ready((total_count, probs))

    # Pure-JAX reference of the module's forward (un-fused, un-folded form).
    p_mean_ref = jax.nn.softmax(x @ w_mean + b_mean, axis=-1) * l
    tc_ref = jnp.exp(x @ w_tc + b_tc)
    probs_ref = p_mean_ref / (p_mean_ref + tc_ref)

    # Host-side equivalents of the module's sanity asserts (torch asserts /
    # isnan checks). The tdist.Independent(NegativeBinomial(...)) object has no
    # Pallas equivalent — we return its parameter tensors.
    # TODO(synk): wrap (total_count, probs) in a distribution object if needed.
    assert bool(jnp.any(p_mean_ref > 1e-05)) and bool(jnp.any(p_mean_ref < 1000.0))
    assert bool(jnp.any(total_count > 1e-05)) and bool(jnp.any(total_count < 1000.0))
    assert not bool(jnp.any(jnp.isnan(total_count)))
    assert not bool(jnp.any(jnp.isnan(probs)))

    # Numerical check against the pure-JAX reference.
    assert jnp.allclose(total_count, tc_ref, rtol=2e-5, atol=1e-5), (
        float(jnp.max(jnp.abs(total_count - tc_ref))))
    assert jnp.allclose(probs, probs_ref, rtol=2e-5, atol=1e-5), (
        float(jnp.max(jnp.abs(probs - probs_ref))))

    print("KERNEL_OK")
</pallas_src>

<mosaic_0001>
module attributes {stable_mosaic.version = 11 : i64} {
  func.func @_snb_kernel(%arg0: i32, %arg1: memref<16x128xf32, #tpu.memory_space<vmem>>, %arg2: memref<16x1xf32, #tpu.memory_space<vmem>>, %arg3: memref<128x256xf32, #tpu.memory_space<vmem>>, %arg4: memref<1x256xf32, #tpu.memory_space<vmem>>, %arg5: memref<16x128xf32, #tpu.memory_space<vmem>>, %arg6: memref<16x128xf32, #tpu.memory_space<vmem>>) attributes {dimension_semantics = [#tpu.dimension_semantics<parallel>], iteration_bounds = array<i64: 1>, scalar_prefetch = 0 : i64, scratch_operands = 0 : i64, tpu.core_type = #tpu.core_type<tc>, window_params = [{transform_indices = @transform_0, window_bounds = array<i64: 16, 128>}, {transform_indices = @transform_1, window_bounds = array<i64: 16, 1>}, {pipeline_mode = #tpu.pipeline_mode<synchronous>, transform_indices = @transform_2, window_bounds = array<i64: 128, 256>}, {pipeline_mode = #tpu.pipeline_mode<synchronous>, transform_indices = @transform_3, window_bounds = array<i64: 1, 256>}, {transform_indices = @transform_4, window_bounds = array<i64: 16, 128>}, {transform_indices = @transform_5, window_bounds = array<i64: 16, 128>}]} {
    %c0 = arith.constant 0 : index
    %c0_0 = arith.constant 0 : index
    %0 = vector.load %arg1[%c0, %c0_0] : memref<16x128xf32, #tpu.memory_space<vmem>>, vector<16x128xf32>
    %c0_1 = arith.constant 0 : index
    %c0_2 = arith.constant 0 : index
    %1 = vector.load %arg3[%c0_1, %c0_2] : memref<128x256xf32, #tpu.memory_space<vmem>>, vector<128x256xf32>
    %cst = arith.constant dense<0.000000e+00> : vector<16x256xf32>
    %2 = tpu.matmul %0, %1, %cst {dimension_numbers = #tpu.dot_dimension_numbers<[1], [0], [0], [1], [0, 0, 1, 1], [], []>} : vector<16x128xf32>, vector<128x256xf32>, vector<16x256xf32> -> vector<16x256xf32>
    %c0_3 = arith.constant 0 : index
    %c0_4 = arith.constant 0 : index
    %3 = vector.load %arg4[%c0_3, %c0_4] : memref<1x256xf32, #tpu.memory_space<vmem>>, vector<1x256xf32>
    %4 = vector.broadcast %3 : vector<1x256xf32> to vector<16x256xf32>
    %5 = arith.addf %2, %4 : vector<16x256xf32>
    %6 = vector.extract_strided_slice %5 {offsets = [0, 0], sizes = [16, 128], strides = [1, 1]} : vector<16x256xf32> to vector<16x128xf32>
    %7 = vector.extract_strided_slice %5 {offsets = [0, 128], sizes = [16, 128], strides = [1, 1]} : vector<16x256xf32> to vector<16x128xf32>
    %cst_5 = arith.constant dense<0xFF800000> : vector<16xf32>
    %8 = vector.multi_reduction <maximumf>, %6, %cst_5 [1] : vector<16x128xf32> to vector<16xf32>
    %9 = vector.shape_cast %8 : vector<16xf32> to vector<16x1xf32>
    %10 = vector.broadcast %9 : vector<16x1xf32> to vector<16x128xf32>
    %11 = arith.subf %6, %10 : vector<16x128xf32>
    %12 = math.exp %11 : vector<16x128xf32>
    %cst_6 = arith.constant dense<0.000000e+00> : vector<16xf32>
    %13 = vector.multi_reduction <add>, %12, %cst_6 [1] : vector<16x128xf32> to vector<16xf32>
    %14 = vector.shape_cast %13 : vector<16xf32> to vector<16x1xf32>
    %15 = math.exp %7 : vector<16x128xf32>
    %c0_7 = arith.constant 0 : index
    %c0_8 = arith.constant 0 : index
    %16 = vector.load %arg2[%c0_7, %c0_8] : memref<16x1xf32, #tpu.memory_space<vmem>>, vector<16x1xf32>
    %17 = vector.broadcast %16 : vector<16x1xf32> to vector<16x128xf32>
    %18 = arith.mulf %12, %17 : vector<16x128xf32>
    %19 = vector.broadcast %14 : vector<16x1xf32> to vector<16x128xf32>
    %20 = arith.mulf %15, %19 : vector<16x128xf32>
    %21 = arith.addf %18, %20 : vector<16x128xf32>
    %22 = arith.divf %18, %21 : vector<16x128xf32>
    %c0_9 = arith.constant 0 : index
    %c0_10 = arith.constant 0 : index
    %23 = vector.load %arg5[%c0_9, %c0_10] : memref<16x128xf32, #tpu.memory_space<vmem>>, vector<16x128xf32>
    tpu.vector_store %arg5[%c0_9, %c0_10], %15 {strides = array<i32>} : memref<16x128xf32, #tpu.memory_space<vmem>>, vector<16x128xf32>,
    %c0_11 = arith.constant 0 : index
    %c0_12 = arith.constant 0 : index
    %24 = vector.load %arg6[%c0_11, %c0_12] : memref<16x128xf32, #tpu.memory_space<vmem>>, vector<16x128xf32>
    tpu.vector_store %arg6[%c0_11, %c0_12], %22 {strides = array<i32>} : memref<16x128xf32, #tpu.memory_space<vmem>>, vector<16x128xf32>,
    return
  }
  func.func @transform_0(%arg0: i32) -> (i32, i32) {
    %c0_i32 = arith.constant 0 : i32
    %c0_i32_0 = arith.constant 0 : i32
    return %arg0, %c0_i32 : i32, i32
  }
  func.func @transform_1(%arg0: i32) -> (i32, i32) {
    %c0_i32 = arith.constant 0 : i32
    %c0_i32_0 = arith.constant 0 : i32
    return %arg0, %c0_i32 : i32, i32
  }
  func.func @transform_2(%arg0: i32) -> (i32, i32) {
    %c0_i32 = arith.constant 0 : i32
    %c0_i32_0 = arith.constant 0 : i32
    %c0_i32_1 = arith.constant 0 : i32
    return %c0_i32, %c0_i32_0 : i32, i32
  }
  func.func @transform_3(%arg0: i32) -> (i32, i32) {
    %c0_i32 = arith.constant 0 : i32
    %c0_i32_0 = arith.constant 0 : i32
    %c0_i32_1 = arith.constant 0 : i32
    return %c0_i32, %c0_i32_0 : i32, i32
  }
  func.func @transform_4(%arg0: i32) -> (i32, i32) {
    %c0_i32 = arith.constant 0 : i32
    %c0_i32_0 = arith.constant 0 : i32
    return %arg0, %c0_i32 : i32, i32
  }
  func.func @transform_5(%arg0: i32) -> (i32, i32) {
    %c0_i32 = arith.constant 0 : i32
    %c0_i32_0 = arith.constant 0 : i32
    return %arg0, %c0_i32 : i32, i32
  }
}

</mosaic_0001>

<llo_original>
// kernel: tpu_custom_call.1
$region0: #{tpu_custom_call.1}
  #allocation0 [shape = 'u32[]', space=smem, size = 0x4, offset = 0x4, fixed_abs, tag = 'smem constant byte address 0x4 - core index']
  #allocation1 [shape = 'u32[72,128]{1,0:T(1,128)}', space=vmem, size = 0x9000, scoped, tag = 'internal scratch']
  %s0 = inlined_call_operand.vmem [shape: f32[16,128], index: 0, kind: input, shape index: {}]
  %s1 = inlined_call_operand.vmem [shape: f32[16,1], index: 1, kind: input, shape index: {}]
  %s2 = inlined_call_operand.hbm [shape: f32[128,256], index: 2, kind: input, shape index: {}]
  %s3 = inlined_call_operand.vmem [shape: f32[1,256], index: 3, kind: input, shape index: {}]
  %s4 = inlined_call_operand.hbm [shape: f32[16,128], index: 4, kind: output, shape index: {0}]
  %s5 = inlined_call_operand.hbm [shape: f32[16,128], index: 5, kind: output, shape index: {1}]
  %6 = xla_tuple %s4, %s5
  %s7 = sld [smem:[#allocation0]]
  $region38: #{tpu_custom_call.1} parent=0
    _
  %s9 = ssub.s32 1, %s7
  %s10 = scalar_select 0, %s9, %s7
  $region1: #{tpu_custom_call.1} parent=0
    #allocation2 [shape = 'u8[131072]{0}', space=vmem, size = 0x20000, scoped, tag = 'input window, operand 2, single buffered']
    #allocation3 [shape = 's32[1]{0}', space=sflag, size = 0x4, scoped, tag = 'scoped memory for tpu_custom_call.1']
    #allocation4 [shape = 's32[1]{0}', space=sflag, size = 0x4, scoped, tag = 'scoped memory for tpu_custom_call.1']
    #allocation5 [shape = 'u8[8192]{0}', space=vmem, size = 0x2000, scoped, tag = 'output window, operand 0, single buffered']
    #allocation6 [shape = 'u8[8192]{0}', space=vmem, size = 0x2000, scoped, tag = 'output window, operand 1, single buffered']
    #allocation7 [shape = 's32[1]{0}', space=sflag, size = 0x4, scoped, tag = 'scoped memory for tpu_custom_call.1']
    %11 = vsyncpa [#allocation3], 0
    %12 = vsyncpa [#allocation4], 0
    %13 = vsyncpa [#allocation7], 0
    // Predicated region
    $region2: #{tpu_custom_call.1} parent=1 // pred_check
      _
    $region3: #{tpu_custom_call.1} parent=1 // pred_check_branch
      %15 = sbr.rel (0) target = $region5
    $region4: #{tpu_custom_call.1} parent=1 // pred_region
      _
    $region5: #{tpu_custom_call.1} parent=1 // pred_fallthru
      _
    // Predicated region
    $region6: #{tpu_custom_call.1} parent=1 // pred_check
      _
    $region7: #{tpu_custom_call.1} parent=1 // pred_check_branch
      %17 = sbr.rel (0) target = $region9
    $region8: #{tpu_custom_call.1} parent=1 // pred_region
      _
    $region9: #{tpu_custom_call.1} parent=1 // pred_fallthru
      _
    // Predicated region
    $region10: #{tpu_custom_call.1} parent=1 // pred_check
      _
    $region11: #{tpu_custom_call.1} parent=1 // pred_check_branch
      %19 = sbr.rel (0) target = $region13
    $region12: #{tpu_custom_call.1} parent=1 // pred_region
      %21 = vsyncadd [#allocation3], 0
      %s22 = sshll.u32 %s2, 4
      %s23 = int_to_ptr.hbm [resolvable:$true] %s22
      %s24 = sshll.u32 [#allocation2], 4
      %s25 = int_to_ptr.vmem [resolvable:$true] %s24
      %30 = dma.hbm_to_vmem [thread:$0]  %s23, 4096, %s25, [#allocation3], 256, 256, 16
    $region13: #{tpu_custom_call.1} parent=1 // pred_fallthru
      _
    // Predicated region
    $region14: #{tpu_custom_call.1} parent=1 // pred_check
      _
    $region15: #{tpu_custom_call.1} parent=1 // pred_check_branch
      %32 = sbr.rel (0) target = $region17
    $region16: #{tpu_custom_call.1} parent=1 // pred_region
      _
    $region17: #{tpu_custom_call.1} parent=1 // pred_fallthru
      _
    // Predicated region
    $region18: #{tpu_custom_call.1} parent=1 // pred_check
      _
    $region19: #{tpu_custom_call.1} parent=1 // pred_check_branch
      %34 = sbr.rel (0) target = $region21
    $region20: #{tpu_custom_call.1} parent=1 // pred_region
      %36 = dma.done [#allocation3], 4096
    $region21: #{tpu_custom_call.1} parent=1 // pred_fallthru
      _
    %v37 = vld [vmem:[%s0] sm:$0xff]
    %v38 = vld [vmem:[%s0 + $0x8] sm:$0xff]
    %v39 = vld [vmem:[#allocation2] sm:$0xff]
    %v40 = vld [vmem:[#allocation2 + $0x8] sm:$0xff]
    %v41 = vld [vmem:[#allocation2 + $0x10] sm:$0xff]
    %v42 = vld [vmem:[#allocation2 + $0x18] sm:$0xff]
    %v43 = vld [vmem:[#allocation2 + $0x20] sm:$0xff]
    %v44 = vld [vmem:[#allocation2 + $0x28] sm:$0xff]
    %v45 = vld [vmem:[#allocation2 + $0x30] sm:$0xff]
    %v46 = vld [vmem:[#allocation2 + $0x38] sm:$0xff]
    %v47 = vld [vmem:[#allocation2 + $0x40] sm:$0xff]
    %v48 = vld [vmem:[#allocation2 + $0x48] sm:$0xff]
    %v49 = vld [vmem:[#allocation2 + $0x50] sm:$0xff]
    %v50 = vld [vmem:[#allocation2 + $0x58] sm:$0xff]
    %v51 = vld [vmem:[#allocation2 + $0x60] sm:$0xff]
    %v52 = vld [vmem:[#allocation2 + $0x68] sm:$0xff]
    %v53 = vld [vmem:[#allocation2 + $0x70] sm:$0xff]
    %v54 = vld [vmem:[#allocation2 + $0x78] sm:$0xff]
    %v55 = vld [vmem:[#allocation2 + $0x80] sm:$0xff]
    %v56 = vld [vmem:[#allocation2 + $0x88] sm:$0xff]
    %v57 = vld [vmem:[#allocation2 + $0x90] sm:$0xff]
    %v58 = vld [vmem:[#allocation2 + $0x98] sm:$0xff]
    %v59 = vld [vmem:[#allocation2 + $0xa0] sm:$0xff]
    %v60 = vld [vmem:[#allocation2 + $0xa8] sm:$0xff]
    %v61 = vld [vmem:[#allocation2 + $0xb0] sm:$0xff]
    %v62 = vld [vmem:[#allocation2 + $0xb8] sm:$0xff]
    %v63 = vld [vmem:[#allocation2 + $0xc0] sm:$0xff]
    %v64 = vld [vmem:[#allocation2 + $0xc8] sm:$0xff]
    %v65 = vld [vmem:[#allocation2 + $0xd0] sm:$0xff]
    %v66 = vld [vmem:[#allocation2 + $0xd8] sm:$0xff]
    %v67 = vld [vmem:[#allocation2 + $0xe0] sm:$0xff]
    %v68 = vld [vmem:[#allocation2 + $0xe8] sm:$0xff]
    %v69 = vld [vmem:[#allocation2 + $0xf0] sm:$0xff]
    %v70 = vld [vmem:[#allocation2 + $0xf8] sm:$0xff]
    %v71 = vld [vmem:[%s3] sm:$0x3]
    %v73 = vperm.slane %v71, 0
    %v74 = vperm.slane %v71, 1
    %77 = vmatpush.msra.mxu0 %v69
    %78 = vmatpush.msra.mxu0 %v67
    %79 = vmatpush.msra.mxu0 %v65
    %80 = vmatpush.msra.mxu0 %v63
    %81 = vmatpush.msra.mxu0 %v61
    %82 = vmatpush.msra.mxu0 %v59
    %83 = vmatpush.msra.mxu0 %v57
    %84 = vmatpush.msra.mxu0 %v55
    %85 = vmatpush.msra.mxu0 %v53
    %86 = vmatpush.msra.mxu0 %v51
    %87 = vmatpush.msra.mxu0 %v49
    %88 = vmatpush.msra.mxu0 %v47
    %89 = vmatpush.msra.mxu0 %v45
    %90 = vmatpush.msra.mxu0 %v43
    %91 = vmatpush.msra.mxu0 %v41
    %92 = vmatpush.msra.mxu0 %v39
    %93 = vmatmul.f32.gmra.mxu0 %v37
    %v94 = vpop.f32.mrf.mxu0
    %v95 = vadd.f32 %v73, %v94
    %96 = vmatmul.f32.gmra.mxu0 %v38
    %v97 = vpop.f32.mrf.mxu0
    %v98 = vadd.f32 %v73, %v97
    %99 = vdwg.mxu0
    %100 = vmatpush.msra.mxu0 %v70
    %101 = vmatpush.msra.mxu0 %v68
    %102 = vmatpush.msra.mxu0 %v66
    %103 = vmatpush.msra.mxu0 %v64
    %104 = vmatpush.msra.mxu0 %v62
    %105 = vmatpush.msra.mxu0 %v60
    %106 = vmatpush.msra.mxu0 %v58
    %107 = vmatpush.msra.mxu0 %v56
    %108 = vmatpush.msra.mxu0 %v54
    %109 = vmatpush.msra.mxu0 %v52
    %110 = vmatpush.msra.mxu0 %v50
    %111 = vmatpush.msra.mxu0 %v48
    %112 = vmatpush.msra.mxu0 %v46
    %113 = vmatpush.msra.mxu0 %v44
    %114 = vmatpush.msra.mxu0 %v42
    %115 = vmatpush.msra.mxu0 %v40
    %116 = vmatmul.f32.gmra.mxu0 %v37
    %v117 = vpop.f32.mrf.mxu0
    %v118 = vadd.f32 %v74, %v117
    %119 = vmatmul.f32.gmra.mxu0 %v38
    %v120 = vpop.f32.mrf.mxu0
    %v121 = vadd.f32 %v74, %v120
    %122 = vdwg.mxu0
    %123 = vmax.xlane.f32.xlu0 %v95
    %v124 = vpop.xlane.xlu0 %123
    %125 = vmax.xlane.f32.xlu0 %v98
    %v126 = vpop.xlane.xlu0 %125
    %v127 = vsub.f32 %v95, %v124
    %v128 = vsub.f32 %v98, %v126
    %v129 = vmul.f32 %v127, 1.442695
    %v130 = vpow.pop %v129
    %v131 = vmul.f32 %v128, 1.442695
    %v132 = vpow.pop %v131
    %133 = vadd.xlane.f32.xlu0 %v130
    %v134 = vpop.xlane.xlu0 %133
    %135 = vadd.xlane.f32.xlu0 %v132
    %v136 = vpop.xlane.xlu0 %135
    %v137 = vmul.f32 %v118, 1.442695
    %v138 = vpow.pop %v137
    %v139 = vmul.f32 %v121, 1.442695
    %v140 = vpow.pop %v139
    %v141 = vld [vmem:[%s1] sm:$0xff]
    %v142 = vld [vmem:[%s1 + $0x8] sm:$0xff]
    %144 = vset.pattern.permute.xlu0 0
    %145 = vperm.xlu0 %144, %v141
    %v146 = vpop.permute.xlu0 %145
    %149 = vset.pattern.permute.xlu0 0
    %150 = vperm.xlu0 %149, %v142
    %v151 = vpop.permute.xlu0 %150
    %v153 = vmul.f32 %v130, %v146
    %v154 = vmul.f32 %v132, %v151
    %v155 = vmul.f32 %v138, %v134
    %v156 = vmul.f32 %v140, %v136
    %v157 = vadd.f32 %v153, %v155
    %v158 = vadd.f32 %v154, %v156
    %v159 = vrcp.pop %v157
    %v160 = vmul.f32 %v157, %v159
    %v161 = vsub.f32 1.0, %v160
    %v162 = vmul.f32 %v159, %v161
    %v163 = vadd.f32 %v159, %v162
    %vm164 = vweird.f32 %v157
    %vm165 = vweird.f32 %v159
    %vm166 = vmor %vm164, %vm165
    %v167 = vsel %vm166, %v159, %v163
    %v168 = vand.u32 2147483647, %v157
    %vm169 = vcmp.eq.f32.partialorder %v168, 8.507059e+37
    %v170 = vand.u32 %v157, 2147483648
    %v171 = vor.u32 1.1754944e-38, %v170
    %v172 = vsel %vm169, %v171, %v167
    %v173 = vmul.f32 %v153, %v172
    %v174 = vrcp.pop %v158
    %v175 = vmul.f32 %v158, %v174
    %v176 = vsub.f32 1.0, %v175
    %v177 = vmul.f32 %v174, %v176
    %v178 = vadd.f32 %v174, %v177
    %vm179 = vweird.f32 %v158
    %vm180 = vweird.f32 %v174
    %vm181 = vmor %vm179, %vm180
    %v182 = vsel %vm181, %v174, %v178
    %v183 = vand.u32 2147483647, %v158
    %vm184 = vcmp.eq.f32.partialorder %v183, 8.507059e+37
    %v185 = vand.u32 %v158, 2147483648
    %v186 = vor.u32 1.1754944e-38, %v185
    %v187 = vsel %vm184, %v186, %v182
    %v188 = vmul.f32 %v154, %v187
    %189 = vst [vmem:[#allocation5] sm:$0xff] %v138
    %190 = vst [vmem:[#allocation5 + $0x8] sm:$0xff] %v140
    %191 = vst [vmem:[#allocation6] sm:$0xff] %v173
    %192 = vst [vmem:[#allocation6 + $0x8] sm:$0xff] %v188
    // Predicated region
    $region22: #{tpu_custom_call.1} parent=1 // pred_check
      _
    $region23: #{tpu_custom_call.1} parent=1 // pred_check_branch
      %194 = sbr.rel (0) target = $region25
    $region24: #{tpu_custom_call.1} parent=1 // pred_region
      %196 = vsyncadd [#allocation4], 0
      %s197 = sshll.u32 [#allocation5], 4
      %s198 = int_to_ptr.vmem [resolvable:$true] %s197
      %s199 = sshll.u32 %s4, 4
      %s200 = int_to_ptr.hbm [resolvable:$true] %s199
      %205 = dma.vmem_to_hbm [thread:$0]  %s198, 256, %s200, [#allocation4], 128, 128, 8
    $region25: #{tpu_custom_call.1} parent=1 // pred_fallthru
      _
    // Predicated region
    $region26: #{tpu_custom_call.1} parent=1 // pred_check
      _
    $region27: #{tpu_custom_call.1} parent=1 // pred_check_branch
      %207 = sbr.rel (0) target = $region29
    $region28: #{tpu_custom_call.1} parent=1 // pred_region
      %209 = vsyncadd [#allocation7], 0
      %s210 = sshll.u32 [#allocation6], 4
      %s211 = int_to_ptr.vmem [resolvable:$true] %s210
      %s212 = sshll.u32 %s5, 4
      %s213 = int_to_ptr.hbm [resolvable:$true] %s212
      %218 = dma.vmem_to_hbm [thread:$0]  %s211, 256, %s213, [#allocation7], 128, 128, 8
    $region29: #{tpu_custom_call.1} parent=1 // pred_fallthru
      _
    // Predicated region
    $region30: #{tpu_custom_call.1} parent=1 // pred_check
      _
    $region31: #{tpu_custom_call.1} parent=1 // pred_check_branch
      %220 = sbr.rel (0) target = $region33
    $region32: #{tpu_custom_call.1} parent=1 // pred_region
      %222 = dma.done [#allocation4], 256
    $region33: #{tpu_custom_call.1} parent=1 // pred_fallthru
      _
    // Predicated region
    $region34: #{tpu_custom_call.1} parent=1 // pred_check
      _
    $region35: #{tpu_custom_call.1} parent=1 // pred_check_branch
      %224 = sbr.rel (0) target = $region37
    $region36: #{tpu_custom_call.1} parent=1 // pred_region
      %226 = dma.done [#allocation7], 256
    $region37: #{tpu_custom_call.1} parent=1 // pred_fallthru
      _
    %227 = vsyncpa [#allocation3], 1
    %228 = vsyncpa [#allocation4], 1
    %229 = vsyncpa [#allocation7], 1

</llo_original>
